<compile_context>
chip_gen: v6e
topology: v6e:2x2x1
jax: 0.10.0
libtpu: 0.0.40
codegen_flags: <defaults>
</compile_context>

<pallas_src>
import math

import jax
import jax.numpy as jnp
import numpy as np
from jax.experimental import pallas as pl
from jax.experimental.pallas import tpu as pltpu

BN_EPS = 1e-5
_F32 = jnp.float32
_BF16 = jnp.bfloat16


def _round_up(x, m):
    return ((x + m - 1) // m) * m


def _vmem_cap():
    """Usable VMEM budget with headroom for Mosaic internal scratch."""
    try:
        cap = int(getattr(pltpu.get_tpu_info(), "vmem_capacity_bytes", 128 << 20))
    except Exception:  # e.g. interpret mode
        cap = 128 << 20
    # ~48 MiB usable on v7x (64 MiB physical), ~96 MiB on v5e/v6e (128 MiB).
    return max(int(cap * 3 // 4), 16 << 20)


# ----------------------------------------------------------------------------
# Kernels
# ----------------------------------------------------------------------------
def _gin_layer_kernel(adj_ref, h_ref, w1_ref, b1_ref, w2_ref, b2_ref,
                      out_ref, acc_ref):
    """GINConv(MLP([fin,h,h])) + post-conv relu; adjacency contraction K-tiled.

    adj_ref: [row_tile, k_tile] bf16 tile of (A + I)   (eps=0 self term folded)
    h_ref:   [k_tile, fin]      bf16 k-slice of previous-layer activations
    acc_ref: [row_tile, fin]    f32 VMEM accumulator (persistent across k)
    out_ref: [row_tile, H]      bf16 (written only at the last k step)
    """
    k = pl.program_id(1)

    @pl.when(k == 0)
    def _():
        acc_ref[...] = jnp.zeros_like(acc_ref)

    # partial (A + I)[rows, k-slice] @ h[k-slice]  (f32 accumulation on the MXU)
    acc_ref[...] += jnp.dot(adj_ref[...], h_ref[...], preferred_element_type=_F32)

    @pl.when(k == pl.num_programs(1) - 1)
    def _():
        # inner MLP([fin, h, h]): lin -> relu -> lin, then BasicGNN post-relu
        z = jnp.dot(acc_ref[...].astype(_BF16), w1_ref[...],
                    preferred_element_type=_F32) + b1_ref[...]
        z = jnp.maximum(z, 0.0)
        z = jnp.dot(z.astype(_BF16), w2_ref[...],
                    preferred_element_type=_F32) + b2_ref[...]
        out_ref[...] = jnp.maximum(z, 0.0).astype(out_ref.dtype)


def _gin_layer1_kernel(adj_ref, hw1_ref, b1_ref, w2_ref, b2_ref,
                       out_ref, acc_ref):
    """Layer-1 variant: h @ W1 is hoisted to the host (K=7 matmul), using
    (A' h) W1 == A' (h W1), so the epilogue is just +b1 / relu / W2 / relu."""
    k = pl.program_id(1)

    @pl.when(k == 0)
    def _():
        acc_ref[...] = jnp.zeros_like(acc_ref)

    acc_ref[...] += jnp.dot(adj_ref[...], hw1_ref[...],
                            preferred_element_type=_F32)

    @pl.when(k == pl.num_programs(1) - 1)
    def _():
        z = jnp.maximum(acc_ref[...] + b1_ref[...], 0.0)
        z = jnp.dot(z.astype(_BF16), w2_ref[...],
                    preferred_element_type=_F32) + b2_ref[...]
        out_ref[...] = jnp.maximum(z, 0.0).astype(out_ref.dtype)


def _head_kernel(pool_ref, x1_ref, x2_ref, x3_ref,
                 wjk0, wjk1, wjk2, cb_ref, wc1, bc1, wc2, bc2,
                 out_ref, acc1, acc2, acc3):
    """global_add_pool (node-tiled, accumulated) + JK 'cat' linear + classifier.

    Pooling is commuted before the JK linear:
      pool @ (x1 W0 + x2 W1 + x3 W2 + 1*b) ==
      (pool@x1) W0 + (pool@x2) W1 + (pool@x3) W2 + counts*b
    cb_ref = counts * bjk  (precomputed on host, [B, H] f32).
    """
    i = pl.program_id(0)

    @pl.when(i == 0)
    def _():
        acc1[...] = jnp.zeros_like(acc1)
        acc2[...] = jnp.zeros_like(acc2)
        acc3[...] = jnp.zeros_like(acc3)

    p = pool_ref[...]
    acc1[...] += jnp.dot(p, x1_ref[...], preferred_element_type=_F32)
    acc2[...] += jnp.dot(p, x2_ref[...], preferred_element_type=_F32)
    acc3[...] += jnp.dot(p, x3_ref[...], preferred_element_type=_F32)

    @pl.when(i == pl.num_programs(0) - 1)
    def _():
        xj = (jnp.dot(acc1[...].astype(_BF16), wjk0[...], preferred_element_type=_F32)
              + jnp.dot(acc2[...].astype(_BF16), wjk1[...], preferred_element_type=_F32)
              + jnp.dot(acc3[...].astype(_BF16), wjk2[...], preferred_element_type=_F32)
              + cb_ref[...])
        # classifier: lin (eval BatchNorm folded into wc1/bc1) -> relu -> lin
        z = jnp.dot(xj.astype(_BF16), wc1[...], preferred_element_type=_F32) + bc1[...]
        z = jnp.maximum(z, 0.0)
        # Output last dim is tiny (C=2) -> masked store; negligible at this size.
        out_ref[...] = jnp.dot(z.astype(_BF16), wc2[...],
                               preferred_element_type=_F32) + bc2[...]


# ----------------------------------------------------------------------------
# pallas_call wrappers
# ----------------------------------------------------------------------------
def _run_gin_layer(adj, h, w1, b1, w2, b2, row_tile, k_tile, premultiplied=False):
    n_pad = adj.shape[0]
    fin = h.shape[1]
    hdim = w2.shape[1]
    grid = (n_pad // row_tile, n_pad // k_tile)

    in_specs = [
        pl.BlockSpec((row_tile, k_tile), lambda i, k: (i, k)),   # adj tile
        pl.BlockSpec((k_tile, fin), lambda i, k: (k, 0)),        # activations k-tile
    ]
    args = [adj, h]
    if not premultiplied:
        in_specs.append(pl.BlockSpec((fin, hdim), lambda i, k: (0, 0)))  # w1
        args.append(w1)
    in_specs += [
        pl.BlockSpec((1, hdim), lambda i, k: (0, 0)),            # b1
        pl.BlockSpec((hdim, hdim), lambda i, k: (0, 0)),         # w2
        pl.BlockSpec((1, hdim), lambda i, k: (0, 0)),            # b2
    ]
    args += [b1, w2, b2]

    # VMEM budget: double-buffered streamed blocks + (small) invariant weights
    # + f32 accumulator scratch + headroom.
    need = 2 * (row_tile * k_tile * 2 + k_tile * fin * 2 + row_tile * hdim * 2)
    need += 2 * (fin * hdim * 2 + hdim * hdim * 2 + 2 * hdim * 4)
    need += row_tile * fin * 4
    vmem_limit = int(min(max(need + (4 << 20), 16 << 20), _vmem_cap()))

    kernel = _gin_layer1_kernel if premultiplied else _gin_layer_kernel

    return pl.pallas_call(
        kernel,
        out_shape=jax.ShapeDtypeStruct((n_pad, hdim), _BF16),
        grid_spec=pltpu.PrefetchScalarGridSpec(
            num_scalar_prefetch=0,
            grid=grid,
            in_specs=in_specs,
            out_specs=pl.BlockSpec((row_tile, hdim), lambda i, k: (i, 0)),
            scratch_shapes=[pltpu.VMEM((row_tile, fin), _F32)],
        ),
        compiler_params=pltpu.CompilerParams(
            # Row tiles independent ("parallel", v7x 2-TC sharding); k is the
            # reduction axis, kept last and "arbitrary".
            dimension_semantics=("parallel", "arbitrary"),
            vmem_limit_bytes=vmem_limit,
        ),
    )(*args)


def _run_head(pool, x1, x2, x3, wjk0, wjk1, wjk2, count_bias,
              wc1, bc1, wc2, bc2, node_tile, num_classes):
    b, n_pad = pool.shape
    hdim = x1.shape[1]
    grid = (n_pad // node_tile,)

    inv_sq = lambda: pl.BlockSpec((hdim, hdim), lambda i: (0, 0))
    in_specs = [
        pl.BlockSpec((b, node_tile), lambda i: (0, i)),          # pool node-tile
        pl.BlockSpec((node_tile, hdim), lambda i: (i, 0)),       # x1 node-tile
        pl.BlockSpec((node_tile, hdim), lambda i: (i, 0)),       # x2 node-tile
        pl.BlockSpec((node_tile, hdim), lambda i: (i, 0)),       # x3 node-tile
        inv_sq(), inv_sq(), inv_sq(),                            # wjk0..2
        pl.BlockSpec((b, hdim), lambda i: (0, 0)),               # counts * bjk
        inv_sq(),                                                # wc1 (BN folded)
        pl.BlockSpec((1, hdim), lambda i: (0, 0)),               # bc1 (BN folded)
        pl.BlockSpec((hdim, num_classes), lambda i: (0, 0)),     # wc2
        pl.BlockSpec((1, num_classes), lambda i: (0, 0)),        # bc2
    ]
    args = [pool, x1, x2, x3, wjk0, wjk1, wjk2, count_bias, wc1, bc1, wc2, bc2]

    need = 2 * (b * node_tile * 2 + 3 * node_tile * hdim * 2)            # streamed
    need += 2 * (4 * hdim * hdim * 2 + hdim * num_classes * 2
                 + 2 * hdim * 4 + b * hdim * 4 + num_classes * 4)        # invariants
    need += 3 * b * hdim * 4 + b * num_classes * 4                       # scratch+out
    vmem_limit = int(min(max(need + (4 << 20), 16 << 20), _vmem_cap()))

    return pl.pallas_call(
        _head_kernel,
        out_shape=jax.ShapeDtypeStruct((b, num_classes), _F32),
        grid_spec=pltpu.PrefetchScalarGridSpec(
            num_scalar_prefetch=0,
            grid=grid,
            in_specs=in_specs,
            out_specs=pl.BlockSpec((b, num_classes), lambda i: (0, 0)),
            scratch_shapes=[pltpu.VMEM((b, hdim), _F32)] * 3,
        ),
        compiler_params=pltpu.CompilerParams(
            dimension_semantics=("arbitrary",),     # node axis is a reduction
            vmem_limit_bytes=vmem_limit,
        ),
    )(*args)


# ----------------------------------------------------------------------------
# Host-side glue
# ----------------------------------------------------------------------------
def gin_forward(x, edge_index, batch, params, num_graphs,
                row_tile=None, k_tile=None):
    """Build dense (A+I) / pooling matrices, fold BN, run the Pallas kernels."""
    (w1_0, b1_0, w2_0, b2_0, w1_1, b1_1, w2_1, b2_1, w1_2, b1_2, w2_2, b2_2,
     wjk0, wjk1, wjk2, bjk, wc1, bc1, bn_g, bn_b, bn_m, bn_v, wc2, bc2) = params

    n = x.shape[0]
    cap = _vmem_cap()
    # Generation-aware defaults: smaller adj blocks on v7x (64 MiB VMEM),
    # bigger on v5e/v6e (128 MiB).  Sweep for a given graph-size regime.
    if row_tile is None:
        row_tile = 256 if cap <= (48 << 20) else 512
    if k_tile is None:
        k_tile = 2048 if cap <= (48 << 20) else 4096
    row_tile = max(16, (row_tile // 16) * 16)        # bf16 sublane-friendly
    k_tile = max(128, (k_tile // 128) * 128)         # lane-aligned

    # Clamp tiles near the padded node count and pad N so both tiles divide it.
    n_base = _round_up(n, 128)
    row_tile = min(row_tile, n_base)
    k_tile = min(k_tile, n_base)
    lcm = row_tile * k_tile // math.gcd(row_tile, k_tile)
    n_pad = _round_up(n, lcm)

    # Dense (A + I), built directly in bf16: sum aggregation + eps=0 self term
    # folded into one matmul.  Entries are small integer counts -> exact in
    # bf16 for counts <= 256.  Padded rows/cols are zero, so padded nodes never
    # contaminate real rows; pool columns mask them out of pooling.
    # TODO(synk): replace the O(N^2) dense adjacency with CSR / scalar-prefetched
    # sparse aggregation for non-toy graph sizes (dense keeps all layers HBM-bound).
    # TODO(synk): on v7x an fp8(e4m3) adjacency (entries 0/1/2 exact) would halve
    # the dominant HBM stream; kept bf16 here for portability to v5e/v6e.
    e = edge_index.shape[1]
    adj = jnp.zeros((n_pad, n_pad), _BF16)
    adj = adj.at[edge_index[1], edge_index[0]].add(jnp.ones((e,), _BF16))
    idx = jnp.arange(n)
    adj = adj.at[idx, idx].add(jnp.ones((n,), _BF16))

    pool = jax.nn.one_hot(batch, num_graphs, dtype=_BF16).T          # [B, N]
    pool = jnp.pad(pool, ((0, 0), (0, n_pad - n)))                   # exact in bf16
    counts = jnp.bincount(batch, length=num_graphs).astype(_F32).reshape(
        num_graphs, 1)                                               # nodes/graph

    bw = lambda w: w.astype(_BF16)

    # Layer 1: hoist the K=7 matmul out of the kernel ((A'x)W1 == A'(xW1)) so
    # the in-kernel contraction operand is lane-dense [n_pad, H].
    hw1 = jnp.dot(x.astype(_BF16), bw(w1_0), preferred_element_type=_F32)
    hw1 = jnp.pad(hw1, ((0, n_pad - n), (0, 0))).astype(_BF16)

    x1 = _run_gin_layer(adj, hw1, None, b1_0, bw(w2_0), b2_0,
                        row_tile, k_tile, premultiplied=True)
    x2 = _run_gin_layer(adj, x1, bw(w1_1), b1_1, bw(w2_1), b2_1, row_tile, k_tile)
    x3 = _run_gin_layer(adj, x2, bw(w1_2), b1_2, bw(w2_2), b2_2, row_tile, k_tile)

    # Fold eval-mode BatchNorm into the first classifier linear (host side).
    scale = bn_g / jnp.sqrt(bn_v + BN_EPS)
    wc1_f = (wc1 * scale).astype(_BF16)
    bc1_f = ((bc1 - bn_m) * scale + bn_b).astype(_F32)

    # Pool-before-JK: the per-node JK bias becomes counts * bjk per graph.
    count_bias = (counts * bjk).astype(_F32)                          # [B, H]

    return _run_head(pool, x1, x2, x3,
                     bw(wjk0), bw(wjk1), bw(wjk2), count_bias,
                     wc1_f, bc1_f, bw(wc2), bc2,
                     node_tile=k_tile, num_classes=wc2.shape[-1])


def init_params(key, in_feat=7, h_feat=128, num_classes=2):
    """Deterministic synthetic parameters matching the module's shapes."""
    def lin(k, fan_in, fan_out):
        kw, kb = jax.random.split(k)
        w = jax.random.normal(kw, (fan_in, fan_out), _F32) / jnp.sqrt(fan_in)
        b = jax.random.normal(kb, (1, fan_out), _F32) * 0.01
        return w, b

    keys = jax.random.split(key, 10)
    params = []
    fin = in_feat
    for l in range(3):                                   # 3 GINConv layers
        w1, b1 = lin(keys[2 * l], fin, h_feat)
        w2, b2 = lin(keys[2 * l + 1], h_feat, h_feat)
        params += [w1, b1, w2, b2]
        fin = h_feat

    wjk, bjk = lin(keys[6], 3 * h_feat, h_feat)          # jk 'cat' linear
    params += [wjk[:h_feat], wjk[h_feat:2 * h_feat], wjk[2 * h_feat:], bjk]

    wc1, bc1 = lin(keys[7], h_feat, h_feat)              # classifier lin 1
    bn_g = jnp.ones((1, h_feat), _F32)                   # BatchNorm (eval stats)
    bn_b = jnp.zeros((1, h_feat), _F32)
    bn_m = jnp.zeros((1, h_feat), _F32)
    bn_v = jnp.ones((1, h_feat), _F32)
    wc2, bc2 = lin(keys[8], h_feat, num_classes)         # classifier lin 2
    params += [wc1, bc1, bn_g, bn_b, bn_m, bn_v, wc2, bc2]
    return params


def reference_forward(x, edge_index, batch, params, num_graphs):
    """Pure-JAX mirror of the kernel math (bf16 MXU operands, f32 accumulation,
    with the same algebraic rewrites: layer-1 W1 hoist, pool-before-JK)."""
    def mm(a, b):
        return jnp.dot(a.astype(_BF16), b.astype(_BF16), preferred_element_type=_F32)

    n = x.shape[0]
    adj = jnp.zeros((n, n), _F32).at[edge_index[1], edge_index[0]].add(1.0)
    adj = adj + jnp.eye(n, dtype=_F32)                   # eps=0 self term
    pool = jax.nn.one_hot(batch, num_graphs, dtype=_F32).T
    counts = pool.sum(axis=1, keepdims=True)
    (w1_0, b1_0, w2_0, b2_0, w1_1, b1_1, w2_1, b2_1, w1_2, b1_2, w2_2, b2_2,
     wjk0, wjk1, wjk2, bjk, wc1, bc1, bn_g, bn_b, bn_m, bn_v, wc2, bc2) = params

    # layer 1 (W1 hoisted, matching the kernel)
    z = jnp.maximum(mm(adj, mm(x, w1_0)) + b1_0, 0.0)
    x1 = jnp.maximum(mm(z, w2_0) + b2_0, 0.0)

    def layer(h, w1, b1, w2, b2):
        z = mm(adj, h)
        z = jnp.maximum(mm(z, w1) + b1, 0.0)
        return jnp.maximum(mm(z, w2) + b2, 0.0)

    x2 = layer(x1, w1_1, b1_1, w2_1, b2_1)
    x3 = layer(x2, w1_2, b1_2, w2_2, b2_2)

    # pool first (commutes with the JK linear), then JK linear + classifier
    p1, p2, p3 = mm(pool, x1), mm(pool, x2), mm(pool, x3)
    xj = mm(p1, wjk0) + mm(p2, wjk1) + mm(p3, wjk2) + counts * bjk
    scale = bn_g / jnp.sqrt(bn_v + BN_EPS)               # eval BN, folded form
    z = jnp.maximum(mm(xj, wc1 * scale) + (bc1 - bn_m) * scale + bn_b, 0.0)
    return mm(z, wc2) + bc2


if __name__ == "__main__":
    key = jax.random.PRNGKey(0)
    k_x, k_src, k_dst, k_p = jax.random.split(key, 4)

    # Small synthetic batch: 2 graphs x 80 nodes, 7-dim features, h_feat=128
    # (module default -- lane-dense), 2 classes, 480 directed edges.
    NODES_PER_GRAPH, F, H, B, C = 80, 7, 128, 2, 2
    E_PER_GRAPH = 240
    N = B * NODES_PER_GRAPH

    x = jax.random.normal(k_x, (N, F), _F32)
    batch = jnp.repeat(jnp.arange(B, dtype=jnp.int32), NODES_PER_GRAPH)

    srcs, dsts = [], []
    for g in range(B):                                   # edges kept within graph g
        lo, hi = g * NODES_PER_GRAPH, (g + 1) * NODES_PER_GRAPH
        srcs.append(jax.random.randint(jax.random.fold_in(k_src, g),
                                       (E_PER_GRAPH,), lo, hi))
        dsts.append(jax.random.randint(jax.random.fold_in(k_dst, g),
                                       (E_PER_GRAPH,), lo, hi))
    edge_index = jnp.stack([jnp.concatenate(srcs),
                            jnp.concatenate(dsts)]).astype(jnp.int32)
    edge_attr = jnp.ones((edge_index.shape[1], 1), _F32)  # ignored (PyG GINConv)

    params = init_params(k_p, in_feat=F, h_feat=H, num_classes=C)

    # Small tiles so the toy case still exercises the full tiled structure:
    # n_pad = 256 -> layer grid = (16 row tiles x 2 k tiles), head grid = 2 tiles.
    # Leave row_tile/k_tile at their generation-aware defaults for real graphs.
    out = gin_forward(x, edge_index, batch, params, B, row_tile=16, k_tile=128)
    out = jax.block_until_ready(out)

    ref = reference_forward(x, edge_index, batch, params, B)
    np.testing.assert_allclose(np.asarray(out), np.asarray(ref),
                               rtol=2e-2, atol=2e-2)
    print("KERNEL_OK")
</pallas_src>

<mosaic_0001>
module attributes {stable_mosaic.version = 11 : i64} {
  func.func @_gin_layer1_kernel(%arg0: i32, %arg1: i32, %arg2: memref<16x128xbf16, #tpu.memory_space<vmem>>, %arg3: memref<128x128xbf16, #tpu.memory_space<vmem>>, %arg4: memref<1x128xf32, #tpu.memory_space<vmem>>, %arg5: memref<128x128xbf16, #tpu.memory_space<vmem>>, %arg6: memref<1x128xf32, #tpu.memory_space<vmem>>, %arg7: memref<16x128xbf16, #tpu.memory_space<vmem>>, %arg8: memref<16x128xf32, #tpu.memory_space<vmem>>) attributes {dimension_semantics = [#tpu.dimension_semantics<parallel>, #tpu.dimension_semantics<arbitrary>], iteration_bounds = array<i64: 16, 2>, scalar_prefetch = 0 : i64, scratch_operands = 1 : i64, tpu.core_type = #tpu.core_type<tc>, window_params = [{transform_indices = @transform_0, window_bounds = array<i64: 16, 128>}, {transform_indices = @transform_1, window_bounds = array<i64: 128, 128>}, {pipeline_mode = #tpu.pipeline_mode<synchronous>, transform_indices = @transform_2, window_bounds = array<i64: 1, 128>}, {pipeline_mode = #tpu.pipeline_mode<synchronous>, transform_indices = @transform_3, window_bounds = array<i64: 128, 128>}, {pipeline_mode = #tpu.pipeline_mode<synchronous>, transform_indices = @transform_4, window_bounds = array<i64: 1, 128>}, {transform_indices = @transform_5, window_bounds = array<i64: 16, 128>}]} {
    %c0_i32 = arith.constant 0 : i32
    %0 = arith.cmpi eq, %arg1, %c0_i32 : i32
    %1 = arith.extui %0 : i1 to i32
    %c0_i32_0 = arith.constant 0 : i32
    %2 = arith.cmpi ne, %1, %c0_i32_0 : i32
    scf.if %2 {
      %cst_9 = arith.constant 0.000000e+00 : f32
      %12 = vector.broadcast %cst_9 : f32 to vector<16x128xf32>
      %c0_10 = arith.constant 0 : index
      %c0_11 = arith.constant 0 : index
      %13 = vector.load %arg8[%c0_10, %c0_11] : memref<16x128xf32, #tpu.memory_space<vmem>>, vector<16x128xf32>
      tpu.vector_store %arg8[%c0_10, %c0_11], %12 {strides = array<i32>} : memref<16x128xf32, #tpu.memory_space<vmem>>, vector<16x128xf32>,
    } else {
    }
    %c0 = arith.constant 0 : index
    %c0_1 = arith.constant 0 : index
    %3 = vector.load %arg8[%c0, %c0_1] : memref<16x128xf32, #tpu.memory_space<vmem>>, vector<16x128xf32>
    %c0_2 = arith.constant 0 : index
    %c0_3 = arith.constant 0 : index
    %4 = vector.load %arg2[%c0_2, %c0_3] : memref<16x128xbf16, #tpu.memory_space<vmem>>, vector<16x128xbf16>
    %c0_4 = arith.constant 0 : index
    %c0_5 = arith.constant 0 : index
    %5 = vector.load %arg3[%c0_4, %c0_5] : memref<128x128xbf16, #tpu.memory_space<vmem>>, vector<128x128xbf16>
    %cst = arith.constant dense<0.000000e+00> : vector<16x128xf32>
    %6 = tpu.matmul %4, %5, %cst {dimension_numbers = #tpu.dot_dimension_numbers<[1], [0], [0], [1], [0, 0, 1, 1], [], []>} : vector<16x128xbf16>, vector<128x128xbf16>, vector<16x128xf32> -> vector<16x128xf32>
    %7 = arith.addf %3, %6 : vector<16x128xf32>
    %c0_6 = arith.constant 0 : index
    %c0_7 = arith.constant 0 : index
    %8 = vector.load %arg8[%c0_6, %c0_7] : memref<16x128xf32, #tpu.memory_space<vmem>>, vector<16x128xf32>
    tpu.vector_store %arg8[%c0_6, %c0_7], %7 {strides = array<i32>} : memref<16x128xf32, #tpu.memory_space<vmem>>, vector<16x128xf32>,
    %c1_i32 = arith.constant 1 : i32
    %9 = arith.cmpi eq, %arg1, %c1_i32 : i32
    %10 = arith.extui %9 : i1 to i32
    %c0_i32_8 = arith.constant 0 : i32
    %11 = arith.cmpi ne, %10, %c0_i32_8 : i32
    scf.if %11 {
      %c0_9 = arith.constant 0 : index
      %c0_10 = arith.constant 0 : index
      %12 = vector.load %arg8[%c0_9, %c0_10] : memref<16x128xf32, #tpu.memory_space<vmem>>, vector<16x128xf32>
      %c0_11 = arith.constant 0 : index
      %c0_12 = arith.constant 0 : index
      %13 = vector.load %arg4[%c0_11, %c0_12] : memref<1x128xf32, #tpu.memory_space<vmem>>, vector<1x128xf32>
      %14 = vector.broadcast %13 : vector<1x128xf32> to vector<16x128xf32>
      %15 = arith.addf %12, %14 : vector<16x128xf32>
      %cst_13 = arith.constant 0.000000e+00 : f32
      %16 = vector.broadcast %cst_13 : f32 to vector<16x128xf32>
      %17 = arith.maximumf %15, %16 : vector<16x128xf32>
      %18 = arith.truncf %17 : vector<16x128xf32> to vector<16x128xbf16>
      %c0_14 = arith.constant 0 : index
      %c0_15 = arith.constant 0 : index
      %19 = vector.load %arg5[%c0_14, %c0_15] : memref<128x128xbf16, #tpu.memory_space<vmem>>, vector<128x128xbf16>
      %cst_16 = arith.constant dense<0.000000e+00> : vector<16x128xf32>
      %20 = tpu.matmul %18, %19, %cst_16 {dimension_numbers = #tpu.dot_dimension_numbers<[1], [0], [0], [1], [0, 0, 1, 1], [], []>} : vector<16x128xbf16>, vector<128x128xbf16>, vector<16x128xf32> -> vector<16x128xf32>
      %c0_17 = arith.constant 0 : index
      %c0_18 = arith.constant 0 : index
      %21 = vector.load %arg6[%c0_17, %c0_18] : memref<1x128xf32, #tpu.memory_space<vmem>>, vector<1x128xf32>
      %22 = vector.broadcast %21 : vector<1x128xf32> to vector<16x128xf32>
      %23 = arith.addf %20, %22 : vector<16x128xf32>
      %cst_19 = arith.constant 0.000000e+00 : f32
      %24 = vector.broadcast %cst_19 : f32 to vector<16x128xf32>
      %25 = arith.maximumf %23, %24 : vector<16x128xf32>
      %26 = arith.truncf %25 : vector<16x128xf32> to vector<16x128xbf16>
      %c0_20 = arith.constant 0 : index
      %c0_21 = arith.constant 0 : index
      %27 = vector.load %arg7[%c0_20, %c0_21] : memref<16x128xbf16, #tpu.memory_space<vmem>>, vector<16x128xbf16>
      tpu.vector_store %arg7[%c0_20, %c0_21], %26 {strides = array<i32>} : memref<16x128xbf16, #tpu.memory_space<vmem>>, vector<16x128xbf16>,
    } else {
    }
    return
  }
  func.func @transform_0(%arg0: i32, %arg1: i32) -> (i32, i32) {
    %c0_i32 = arith.constant 0 : i32
    return %arg0, %arg1 : i32, i32
  }
  func.func @transform_1(%arg0: i32, %arg1: i32) -> (i32, i32) {
    %c0_i32 = arith.constant 0 : i32
    %c0_i32_0 = arith.constant 0 : i32
    return %arg1, %c0_i32 : i32, i32
  }
  func.func @transform_2(%arg0: i32, %arg1: i32) -> (i32, i32) {
    %c0_i32 = arith.constant 0 : i32
    %c0_i32_0 = arith.constant 0 : i32
    %c0_i32_1 = arith.constant 0 : i32
    return %c0_i32, %c0_i32_0 : i32, i32
  }
  func.func @transform_3(%arg0: i32, %arg1: i32) -> (i32, i32) {
    %c0_i32 = arith.constant 0 : i32
    %c0_i32_0 = arith.constant 0 : i32
    %c0_i32_1 = arith.constant 0 : i32
    return %c0_i32, %c0_i32_0 : i32, i32
  }
  func.func @transform_4(%arg0: i32, %arg1: i32) -> (i32, i32) {
    %c0_i32 = arith.constant 0 : i32
    %c0_i32_0 = arith.constant 0 : i32
    %c0_i32_1 = arith.constant 0 : i32
    return %c0_i32, %c0_i32_0 : i32, i32
  }
  func.func @transform_5(%arg0: i32, %arg1: i32) -> (i32, i32) {
    %c0_i32 = arith.constant 0 : i32
    %c0_i32_0 = arith.constant 0 : i32
    return %arg0, %c0_i32 : i32, i32
  }
}

</mosaic_0001>

<llo_original>
// kernel: tpu_custom_call.1
$region0: #{tpu_custom_call.1}
  #allocation0 [shape = 'u32[]', space=smem, size = 0x4, offset = 0x4, fixed_abs, tag = 'smem constant byte address 0x4 - core index']
  #allocation1 [shape = 'u32[144,128]{1,0:T(1,128)}', space=vmem, size = 0x12000, scoped, tag = 'internal scratch']
  #allocation2 [shape = 'f32[16,128]{1,0:T(8,128)}', space=vmem, size = 0x2000, scoped, tag = 'scratch operand']
  %s0 = inlined_call_operand.hbm [shape: bf16[256,256], index: 0, kind: input, shape index: {}]
  %s1 = inlined_call_operand.hbm [shape: bf16[256,128], index: 1, kind: input, shape index: {}]
  %s2 = inlined_call_operand.vmem [shape: f32[1,128], index: 2, kind: input, shape index: {}]
  %s3 = inlined_call_operand.hbm [shape: bf16[128,128], index: 3, kind: input, shape index: {}]
  %s4 = inlined_call_operand.vmem [shape: f32[1,128], index: 4, kind: input, shape index: {}]
  %s5 = inlined_call_operand.hbm [shape: bf16[256,128], index: 5, kind: output, shape index: {}]
  %s6 = sld [smem:[#allocation0]]
  $region73: #{tpu_custom_call.1} parent=0
    _
  %s8 = ssub.s32 1, %s6
  %s9 = scalar_select 0, %s8, %s6
  $region1: #{tpu_custom_call.1} parent=0
    #allocation3 [shape = 'u8[8192]{0}', space=vmem, size = 0x2000, scoped, tag = 'input window, operand 0']
    #allocation4 [shape = 's32[2]{0}', space=sflag, size = 0x8, scoped, tag = 'scoped memory for tpu_custom_call.1']
    #allocation5 [shape = 's32[2]{0}', space=sflag, size = 0x8, scoped, tag = 'scoped memory for tpu_custom_call.1']
    #allocation6 [shape = 'u8[65536]{0}', space=vmem, size = 0x10000, scoped, tag = 'input window, operand 1']
    #allocation7 [shape = 's32[2]{0}', space=sflag, size = 0x8, scoped, tag = 'scoped memory for tpu_custom_call.1']
    #allocation8 [shape = 'u8[32768]{0}', space=vmem, size = 0x8000, scoped, tag = 'input window, operand 3, single buffered']
    #allocation9 [shape = 'u8[8192]{0}', space=vmem, size = 0x2000, scoped, tag = 'output window, operand 0']
    %10 = vsyncpa [#allocation4], 0
    %s11 = scalar_lea.sflag [#allocation4], 1
    %12 = vsyncpa %s11, 0
    %13 = vsyncpa [#allocation7], 0
    %s14 = scalar_lea.sflag [#allocation7], 1
    %15 = vsyncpa %s14, 0
    %16 = vsyncpa [#allocation5], 0
    %s17 = scalar_lea.sflag [#allocation5], 1
    %18 = vsyncpa %s17, 0
    loop: start=0, step=1, limit=34
    $region2: #{tpu_custom_call.1} parent=1 // loop_pre_header
      _
    $region3: #{tpu_custom_call.1} parent=1 // loop_header
      %s20 = sphi 0, %s24
      %p21 = scmp.ge.s32.totalorder %s20, 34
      %s27 = sphi 0, %s39
      %s28 = sphi 0, %s35
      %s29 = sphi 0, %s27
      %s30 = sphi 0, %s28
      %s31 = sphi 0, %s29
      %s32 = sphi 0, %s30
      %s44 = sphi 0, %s46
      %s47 = sphi 0, %s44
      %s48 = sphi 0, %s47
      %s64 = sphi 0, %s48
      %s70 = sphi 0, %s72
      %s73 = sphi 0, %s70
      %s74 = sphi 0, %s73
      %s90 = sphi 0, %s74
      %s94 = sphi 0, %s94
      %s96 = sphi 0, %s94
      %s97 = sphi 0, %s96
      %s111 = sphi 0, %s97
      %s115 = sphi 0, %s115
      %s117 = sphi 0, %s115
      %s118 = sphi 0, %s117
      %s132 = sphi 0, %s118
      %s136 = sphi 0, %s136
      %s138 = sphi 0, %s136
      %s139 = sphi 0, %s138
      %s153 = sphi 0, %s139
      %s159 = sphi 0, %s161
      %s162 = sphi 0, %s159
      %s163 = sphi 0, %s162
      %s179 = sphi 0, %s163
    $region4: #{tpu_custom_call.1} parent=1 // loop_header_branch
      %23 = sbr.rel (%p21) target = $region8
    $region5: #{tpu_custom_call.1} parent=1 // loop_body
      %s25 = ssub.s32 %s20, 1
      %s26 = ssub.s32 %s20, 2
      %s33 = sadd.s32 1, %s28
      %p34 = scmp.ge.s32.totalorder %s33, 2
      %s35 = scalar_select %p34, 0, %s33
      %s36 = sadd.s32 1, %s27
      %s37 = scalar_select %p34, %s36, %s27
      %p38 = scmp.ge.s32.totalorder %s37, 16
      %s39 = scalar_select %p38, 0, %s37
      %s40 = ssub.s32 %s27, %s39
      %s41 = ssub.s32 %s28, %s35
      %s42 = sor.u32 %s40, %s41
      %p43 = scmp.eq.s32.totalorder %s42, 0
      %s45 = sadd.s32 %s44, 1
      %s46 = scalar_select %p43, %s44, %s45
      %p49 = pneg %p43
      %p50 = scmp.eq.s32.totalorder %s20, 31
      %p51 = por %p49, %p50
      %p52 = scmp.ne.s32.totalorder %s44, %s47
      %p53 = scmp.eq.s32.totalorder %s20, 0
      %p54 = por %p52, %p53
      %p55 = scmp.ne.s32.totalorder %s44, %s47
      %p56 = scmp.eq.s32.totalorder %s25, 31
      %p57 = por %p55, %p56
      %p58 = scmp.ne.s32.totalorder %s47, %s48
      %p59 = scmp.eq.s32.totalorder %s25, 0
      %p60 = por %p58, %p59
      %p61 = scmp.ne.s32.totalorder %s47, %s48
      %p62 = scmp.eq.s32.totalorder %s26, 31
      %p63 = por %p61, %p62
      %p65 = scmp.ne.s32.totalorder %s48, %s64
      %p66 = scmp.eq.s32.totalorder %s26, 0
      %p67 = por %p65, %p66
      %s68 = ssub.s32 %s28, %s35
      %p69 = scmp.eq.s32.totalorder %s68, 0
      %s71 = sadd.s32 %s70, 1
      %s72 = scalar_select %p69, %s70, %s71
      %p75 = pneg %p69
      %p76 = scmp.eq.s32.totalorder %s20, 31
      %p77 = por %p75, %p76
      %p78 = scmp.ne.s32.totalorder %s70, %s73
      %p79 = scmp.eq.s32.totalorder %s20, 0
      %p80 = por %p78, %p79
      %p81 = scmp.ne.s32.totalorder %s70, %s73
      %p82 = scmp.eq.s32.totalorder %s25, 31
      %p83 = por %p81, %p82
      %p84 = scmp.ne.s32.totalorder %s73, %s74
      %p85 = scmp.eq.s32.totalorder %s25, 0
      %p86 = por %p84, %p85
      %p87 = scmp.ne.s32.totalorder %s73, %s74
      %p88 = scmp.eq.s32.totalorder %s26, 31
      %p89 = por %p87, %p88
      %p91 = scmp.ne.s32.totalorder %s74, %s90
      %p92 = scmp.eq.s32.totalorder %s26, 0
      %p93 = por %p91, %p92
      %s95 = sadd.s32 %s94, 1
      %p98 = scmp.eq.s32.totalorder %s20, 31
      %p99 = scmp.ne.s32.totalorder %s94, %s96
      %p100 = scmp.eq.s32.totalorder %s20, 0
      %p101 = por %p99, %p100
      %p102 = scmp.ne.s32.totalorder %s94, %s96
      %p103 = scmp.eq.s32.totalorder %s25, 31
      %p104 = por %p102, %p103
      %p105 = scmp.ne.s32.totalorder %s96, %s97
      %p106 = scmp.eq.s32.totalorder %s25, 0
      %p107 = por %p105, %p106
      %p108 = scmp.ne.s32.totalorder %s96, %s97
      %p109 = scmp.eq.s32.totalorder %s26, 31
      %p110 = por %p108, %p109
      %p112 = scmp.ne.s32.totalorder %s97, %s111
      %p113 = scmp.eq.s32.totalorder %s26, 0
      %p114 = por %p112, %p113
      %s116 = sadd.s32 %s115, 1
      %p119 = scmp.eq.s32.totalorder %s20, 31
      %p120 = scmp.ne.s32.totalorder %s115, %s117
      %p121 = scmp.eq.s32.totalorder %s20, 0
      %p122 = por %p120, %p121
      %p123 = scmp.ne.s32.totalorder %s115, %s117
      %p124 = scmp.eq.s32.totalorder %s25, 31
      %p125 = por %p123, %p124
      %p126 = scmp.ne.s32.totalorder %s117, %s118
      %p127 = scmp.eq.s32.totalorder %s25, 0
      %p128 = por %p126, %p127
      %p129 = scmp.ne.s32.totalorder %s117, %s118
      %p130 = scmp.eq.s32.totalorder %s26, 31
      %p131 = por %p129, %p130
      %p133 = scmp.ne.s32.totalorder %s118, %s132
      %p134 = scmp.eq.s32.totalorder %s26, 0
      %p135 = por %p133, %p134
      %s137 = sadd.s32 %s136, 1
      %p140 = scmp.eq.s32.totalorder %s20, 31
      %p141 = scmp.ne.s32.totalorder %s136, %s138
      %p142 = scmp.eq.s32.totalorder %s20, 0
      %p143 = por %p141, %p142
      %p144 = scmp.ne.s32.totalorder %s136, %s138
      %p145 = scmp.eq.s32.totalorder %s25, 31
      %p146 = por %p144, %p145
      %p147 = scmp.ne.s32.totalorder %s138, %s139
      %p148 = scmp.eq.s32.totalorder %s25, 0
      %p149 = por %p147, %p148
      %p150 = scmp.ne.s32.totalorder %s138, %s139
      %p151 = scmp.eq.s32.totalorder %s26, 31
      %p152 = por %p150, %p151
      %p154 = scmp.ne.s32.totalorder %s139, %s153
      %p155 = scmp.eq.s32.totalorder %s26, 0
      %p156 = por %p154, %p155
      %s157 = ssub.s32 %s27, %s39
      %p158 = scmp.eq.s32.totalorder %s157, 0
      %s160 = sadd.s32 %s159, 1
      %s161 = scalar_select %p158, %s159, %s160
      %p164 = pneg %p158
      %p165 = scmp.eq.s32.totalorder %s20, 31
      %p166 = por %p164, %p165
      %p167 = scmp.ne.s32.totalorder %s159, %s162
      %p168 = scmp.eq.s32.totalorder %s20, 0
      %p169 = por %p167, %p168
      %p170 = scmp.ne.s32.totalorder %s159, %s162
      %p171 = scmp.eq.s32.totalorder %s25, 31
      %p172 = por %p170, %p171
      %p173 = scmp.ne.s32.totalorder %s162, %s163
      %p174 = scmp.eq.s32.totalorder %s25, 0
      %p175 = por %p173, %p174
      %p176 = scmp.ne.s32.totalorder %s162, %s163
      %p177 = scmp.eq.s32.totalorder %s26, 31
      %p178 = por %p176, %p177
      %p180 = scmp.ne.s32.totalorder %s163, %s179
      %p181 = scmp.eq.s32.totalorder %s26, 0
      %p182 = por %p180, %p181
      %p183 = scmp.le.s32.totalorder 1, %s20
      %p184 = scmp.lt.s32.totalorder %s20, 33
      %p185 = pnand %p183, %p184
      %p186 = pneg %p185
      // Predicated region
      $region9: #{tpu_custom_call.1} parent=5 // pred_check
        _
      $region10: #{tpu_custom_call.1} parent=5 // pred_check_branch
        %188 = sbr.rel (%p185) target = $region12
      $region11: #{tpu_custom_call.1} parent=5 // pred_region
        %s189 = ssub.s32 %s20, 1
        // Predicated region
        $region13: #{tpu_custom_call.1} parent=11 // pred_check
          %p190 = pneg %p107
        $region14: #{tpu_custom_call.1} parent=11 // pred_check_branch
          %192 = sbr.rel (%p190) target = $region16
        $region15: #{tpu_custom_call.1} parent=11 // pred_region
          _
        $region16: #{tpu_custom_call.1} parent=11 // pred_fallthru
          _
        // Predicated region
        $region17: #{tpu_custom_call.1} parent=11 // pred_check
          %p193 = pneg %p128
        $region18: #{tpu_custom_call.1} parent=11 // pred_check_branch
          %195 = sbr.rel (%p193) target = $region20
        $region19: #{tpu_custom_call.1} parent=11 // pred_region
          %s197 = ssub.s32 1024, 1024
          %198 = vsyncadd [#allocation7], %s197
          %s199 = sshll.u32 [#allocation8], 4
          %s200 = int_to_ptr.vmem [resolvable:$true] %s199
          %205 = dma.hbm_to_vmem [thread:$0]  %s3, 1024, %s200, [#allocation7], 64, 64, 4
        $region20: #{tpu_custom_call.1} parent=11 // pred_fallthru
          _
        // Predicated region
        $region21: #{tpu_custom_call.1} parent=11 // pred_check
          %p206 = pneg %p149
        $region22: #{tpu_custom_call.1} parent=11 // pred_check_branch
          %208 = sbr.rel (%p206) target = $region24
        $region23: #{tpu_custom_call.1} parent=11 // pred_region
          _
        $region24: #{tpu_custom_call.1} parent=11 // pred_fallthru
          _
      $region12: #{tpu_custom_call.1} parent=5 // pred_fallthru
        _
      %p209 = scmp.lt.s32.totalorder %s20, 32
      // Predicated region
      $region25: #{tpu_custom_call.1} parent=5 // pred_check
        %p210 = pneg %p209
      $region26: #{tpu_custom_call.1} parent=5 // pred_check_branch
        %212 = sbr.rel (%p210) target = $region28
      $region27: #{tpu_custom_call.1} parent=5 // pred_region
        // Predicated region
        $region29: #{tpu_custom_call.1} parent=27 // pred_check
          %p213 = pneg %p54
        $region30: #{tpu_custom_call.1} parent=27 // pred_check_branch
          %215 = sbr.rel (%p213) target = $region32
        $region31: #{tpu_custom_call.1} parent=27 // pred_region
          %s216 = sand.u32 %s44, 1
          %s217 = scalar_lea.sflag [#allocation4], %s216
          %s218 = sand.u32 %s44, 1
          %s219 = smul.addr %s218, 8
          %s220 = scalar_lea.vmem [#allocation3], %s219
          %s221 = smul.u32 2, %s27
          %s223 = ssub.s32 128, 128
          %224 = vsyncadd %s217, %s223
          %s225 = smul.addr %s221, 2
          %s226 = sadd.s32 %s28, %s225
          %s227 = smul.addr %s226, 64
          %s228 = scalar_lea.hbm %s0, %s227
          %s229 = sshll.u32 %s220, 4
          %s230 = int_to_ptr.vmem [resolvable:$true] %s229
          %235 = dma.hbm_to_vmem [thread:$0]  %s228, 128, %s230, %s217, 128, 64, 4
        $region32: #{tpu_custom_call.1} parent=27 // pred_fallthru
          _
        // Predicated region
        $region33: #{tpu_custom_call.1} parent=27 // pred_check
          %p236 = pneg %p80
        $region34: #{tpu_custom_call.1} parent=27 // pred_check_branch
          %238 = sbr.rel (%p236) target = $region36
        $region35: #{tpu_custom_call.1} parent=27 // pred_region
          %s239 = sand.u32 %s20, 1
          %s240 = scalar_lea.sflag [#allocation7], %s239
          %s241 = sand.u32 %s70, 1
          %s242 = smul.addr %s241, 64
          %s243 = scalar_lea.vmem [#allocation6], %s242
          %s244 = smul.u32 16, %s28
          %s246 = ssub.s32 1024, 1024
          %247 = vsyncadd %s240, %s246
          %s248 = smul.addr %s244, 64
          %s249 = scalar_lea.hbm %s1, %s248
          %s250 = sshll.u32 %s243, 4
          %s251 = int_to_ptr.vmem [resolvable:$true] %s250
          %256 = dma.hbm_to_vmem [thread:$0]  %s249, 1024, %s251, %s240, 64, 64, 4
        $region36: #{tpu_custom_call.1} parent=27 // pred_fallthru
          _
      $region28: #{tpu_custom_call.1} parent=5 // pred_fallthru
        _
      %p257 = scmp.le.s32.totalorder 1, %s20
      %p258 = scmp.lt.s32.totalorder %s20, 33
      %p259 = pnand %p257, %p258
      %p260 = pneg %p259
      // Predicated region
      $region37: #{tpu_custom_call.1} parent=5 // pred_check
        _
      $region38: #{tpu_custom_call.1} parent=5 // pred_check_branch
        %262 = sbr.rel (%p259) target = $region40
      $region39: #{tpu_custom_call.1} parent=5 // pred_region
        %s263 = ssub.s32 %s20, 1
        %s264 = sand.u32 %s47, 1
        %s265 = scalar_lea.sflag [#allocation4], %s264
        %s266 = sand.u32 %s47, 1
        %s267 = smul.addr %s266, 8
        %s268 = scalar_lea.vmem [#allocation3], %s267
        // Predicated region
        $region41: #{tpu_custom_call.1} parent=39 // pred_check
          %p269 = pneg %p60
        $region42: #{tpu_custom_call.1} parent=39 // pred_check_branch
          %271 = sbr.rel (%p269) target = $region44
        $region43: #{tpu_custom_call.1} parent=39 // pred_region
          %272 = dma.done %s265, 128
        $region44: #{tpu_custom_call.1} parent=39 // pred_fallthru
          _
        %s273 = sand.u32 %s25, 1
        %s274 = scalar_lea.sflag [#allocation7], %s273
        %s275 = sand.u32 %s73, 1
        %s276 = smul.addr %s275, 64
        %s277 = scalar_lea.vmem [#allocation6], %s276
        // Predicated region
        $region45: #{tpu_custom_call.1} parent=39 // pred_check
          %p278 = pneg %p86
        $region46: #{tpu_custom_call.1} parent=39 // pred_check_branch
          %280 = sbr.rel (%p278) target = $region48
        $region47: #{tpu_custom_call.1} parent=39 // pred_region
          %281 = dma.done %s274, 1024
        $region48: #{tpu_custom_call.1} parent=39 // pred_fallthru
          _
        // Predicated region
        $region49: #{tpu_custom_call.1} parent=39 // pred_check
          %p282 = pneg %p128
        $region50: #{tpu_custom_call.1} parent=39 // pred_check_branch
          %284 = sbr.rel (%p282) target = $region52
        $region51: #{tpu_custom_call.1} parent=39 // pred_region
          %285 = dma.done [#allocation7], 1024
        $region52: #{tpu_custom_call.1} parent=39 // pred_fallthru
          _
        %s286 = sand.u32 %s47, 1
        %s287 = scalar_lea.sflag [#allocation4], %s286
        %s288 = sand.u32 %s47, 1
        %s289 = smul.addr %s288, 8
        %s290 = scalar_lea.vmem [#allocation3], %s289
        %p291 = pneg %p60
        %p292 = pneg %p57
        %s293 = sand.u32 %s25, 1
        %s294 = scalar_lea.sflag [#allocation7], %s293
        %s295 = sand.u32 %s73, 1
        %s296 = smul.addr %s295, 64
        %s297 = scalar_lea.vmem [#allocation6], %s296
        %p298 = pneg %p86
        %p299 = pneg %p83
        %p300 = pneg %p107
        %p301 = pneg %p104
        %p302 = pneg %p128
        %p303 = pneg %p125
        %p304 = pneg %p149
        %p305 = pneg %p146
        %p306 = pneg %p175
        %p307 = pneg %p172
        %s308 = sand.u32 %s162, 1
        %s309 = scalar_lea.sflag [#allocation5], %s308
        %s310 = sand.u32 %s162, 1
        %s311 = smul.addr %s310, 8
        %s312 = scalar_lea.vmem [#allocation9], %s311
        %s313 = smul.u32 2, %s29
        %s314 = smul.u32 16, %s30
        %s315 = smul.u32 2, %s29
        %p317 = scmp.eq.s32.totalorder %s30, 0
        // Predicated region
        $region53: #{tpu_custom_call.1} parent=39 // pred_check
          %p318 = pneg %p317
        $region54: #{tpu_custom_call.1} parent=39 // pred_check_branch
          %320 = sbr.rel (%p318) target = $region56
        $region55: #{tpu_custom_call.1} parent=39 // pred_region
          %321 = vst [vmem:[#allocation2] sm:$0xff] 0.0
          %322 = vst [vmem:[#allocation2 + $0x8] sm:$0xff] 0.0
        $region56: #{tpu_custom_call.1} parent=39 // pred_fallthru
          _
        %v323 = vld [vmem:[#allocation2] sm:$0xff]
        %v324 = vld [vmem:[#allocation2 + $0x8] sm:$0xff]
        %v325 = vld [vmem:[%s268] sm:$0xf]
        %v326 = vld [vmem:[%s268 + $0x4] sm:$0xf]
        %v327 = vld [vmem:[%s277] sm:$0xf]
        %v328 = vld [vmem:[%s277 + $0x4] sm:$0xf]
        %v329 = vld [vmem:[%s277 + $0x8] sm:$0xf]
        %v330 = vld [vmem:[%s277 + $0xc] sm:$0xf]
        %v331 = vld [vmem:[%s277 + $0x10] sm:$0xf]
        %v332 = vld [vmem:[%s277 + $0x14] sm:$0xf]
        %v333 = vld [vmem:[%s277 + $0x18] sm:$0xf]
        %v334 = vld [vmem:[%s277 + $0x1c] sm:$0xf]
        %v335 = vld [vmem:[%s277 + $0x20] sm:$0xf]
        %v336 = vld [vmem:[%s277 + $0x24] sm:$0xf]
        %v337 = vld [vmem:[%s277 + $0x28] sm:$0xf]
        %v338 = vld [vmem:[%s277 + $0x2c] sm:$0xf]
        %v339 = vld [vmem:[%s277 + $0x30] sm:$0xf]
        %v340 = vld [vmem:[%s277 + $0x34] sm:$0xf]
        %v341 = vld [vmem:[%s277 + $0x38] sm:$0xf]
        %v342 = vld [vmem:[%s277 + $0x3c] sm:$0xf]
        %v345 = vunpack.c.l.b16 %v325
        %v346 = vunpack.c.l.b16 %v326
        %v347 = vpack.c.b16 %v346, %v345
        %v365 = vunpack.c.l.b16 %v327
        %v366 = vunpack.c.l.b16 %v328
        %v367 = vunpack.c.l.b16 %v329
        %v368 = vunpack.c.l.b16 %v330
        %v369 = vunpack.c.l.b16 %v331
        %v370 = vunpack.c.l.b16 %v332
        %v371 = vunpack.c.l.b16 %v333
        %v372 = vunpack.c.l.b16 %v334
        %v373 = vunpack.c.l.b16 %v335
        %v374 = vunpack.c.l.b16 %v336
        %v375 = vunpack.c.l.b16 %v337
        %v376 = vunpack.c.l.b16 %v338
        %v377 = vunpack.c.l.b16 %v339
        %v378 = vunpack.c.l.b16 %v340
        %v379 = vunpack.c.l.b16 %v341
        %v380 = vunpack.c.l.b16 %v342
        %v381 = vpack.c.b16 %v366, %v365
        %v382 = vpack.c.b16 %v368, %v367
        %v383 = vpack.c.b16 %v370, %v369
        %v384 = vpack.c.b16 %v372, %v371
        %v385 = vpack.c.b16 %v374, %v373
        %v386 = vpack.c.b16 %v376, %v375
        %v387 = vpack.c.b16 %v378, %v377
        %v388 = vpack.c.b16 %v380, %v379
        %397 = vmatprep.subr.bf16.mxu0 0
        %398 = vmatpush1.bf16.msra.mxu0 %v388
        %399 = vmatprep.subr.bf16.mxu0 0
        %400 = vmatpush1.bf16.msra.mxu0 %v387
        %401 = vmatprep.subr.bf16.mxu0 0
        %402 = vmatpush1.bf16.msra.mxu0 %v386
        %403 = vmatprep.subr.bf16.mxu0 0
        %404 = vmatpush1.bf16.msra.mxu0 %v385
        %405 = vmatprep.subr.bf16.mxu0 0
        %406 = vmatpush1.bf16.msra.mxu0 %v384
        %407 = vmatprep.subr.bf16.mxu0 0
        %408 = vmatpush1.bf16.msra.mxu0 %v383
        %409 = vmatprep.subr.bf16.mxu0 0
        %410 = vmatpush1.bf16.msra.mxu0 %v382
        %411 = vmatprep.subr.bf16.mxu0 0
        %412 = vmatpush1.bf16.msra.mxu0 %v381
        %413 = vmatprep.subr.bf16.mxu0 0
        %414 = vmatpush2.bf16.msra.mxu0 0
        %415 = vmatprep.subr.bf16.mxu0 0
        %416 = vmatpush2.bf16.msra.mxu0 0
        %417 = vmatprep.subr.bf16.mxu0 0
        %418 = vmatpush2.bf16.msra.mxu0 0
        %419 = vmatprep.subr.bf16.mxu0 0
        %420 = vmatpush2.bf16.msra.mxu0 0
        %421 = vmatprep.subr.bf16.mxu0 0
        %422 = vmatpush2.bf16.msra.mxu0 0
        %423 = vmatprep.subr.bf16.mxu0 0
        %424 = vmatpush2.bf16.msra.mxu0 0
        %425 = vmatprep.subr.bf16.mxu0 0
        %426 = vmatpush2.bf16.msra.mxu0 0
        %427 = vmatprep.subr.bf16.mxu0 0
        %428 = vmatpush2.bf16.msra.mxu0 0
        %429 = vmatprep.mubr.bf16.mxu0 0
        %430 = vmatmul.mubr.bf16.gmra.mxu0 %v347
        %v431 = vpop.f32.mrf.mxu0
        %v432 = vadd.f32 0.0, %v431
        %v433 = vpop.f32.mrf.mxu0
        %v434 = vpop.f32.mrf.mxu0
        %v435 = vadd.f32 0.0, %v434
        %v436 = vpop.f32.mrf.mxu0
        %437 = vdwg.mxu0
        %v438 = vadd.f32 %v323, %v432
        %v439 = vadd.f32 %v324, %v435
        %440 = vst [vmem:[#allocation2] sm:$0xff] %v438
        %441 = vst [vmem:[#allocation2 + $0x8] sm:$0xff] %v439
        %p442 = scmp.eq.s32.totalorder %s30, 1
        // Predicated region
        $region57: #{tpu_custom_call.1} parent=39 // pred_check
          %p443 = pneg %p442
        $region58: #{tpu_custom_call.1} parent=39 // pred_check_branch
          %445 = sbr.rel (%p443) target = $region60
        $region59: #{tpu_custom_call.1} parent=39 // pred_region
          %v446 = vld [vmem:[#allocation2] sm:$0xff]
          %v447 = vld [vmem:[#allocation2 + $0x8] sm:$0xff]
          %v448 = vld [vmem:[%s2] sm:$0x1]
          %v450 = vlaneseq
          %v451 = vshrl.u32 %v450, 7
          %v452 = vsub.s32 0, %v451
          %v453 = vrot.slane %v448, %v452
          %v455 = vadd.f32 %v446, %v453
          %v456 = vadd.f32 %v447, %v453
          %v457 = vmax.f32 %v455, 0.0
          %v458 = vmax.f32 %v456, 0.0
          %v459 = vpack.c.bf16 %v458, %v457
          %v460 = vld [vmem:[#allocation8] sm:$0xf]
          %v461 = vld [vmem:[#allocation8 + $0x4] sm:$0xf]
          %v462 = vld [vmem:[#allocation8 + $0x8] sm:$0xf]
          %v463 = vld [vmem:[#allocation8 + $0xc] sm:$0xf]
          %v464 = vld [vmem:[#allocation8 + $0x10] sm:$0xf]
          %v465 = vld [vmem:[#allocation8 + $0x14] sm:$0xf]
          %v466 = vld [vmem:[#allocation8 + $0x18] sm:$0xf]
          %v467 = vld [vmem:[#allocation8 + $0x1c] sm:$0xf]
          %v468 = vld [vmem:[#allocation8 + $0x20] sm:$0xf]
          %v469 = vld [vmem:[#allocation8 + $0x24] sm:$0xf]
          %v470 = vld [vmem:[#allocation8 + $0x28] sm:$0xf]
          %v471 = vld [vmem:[#allocation8 + $0x2c] sm:$0xf]
          %v472 = vld [vmem:[#allocation8 + $0x30] sm:$0xf]
          %v473 = vld [vmem:[#allocation8 + $0x34] sm:$0xf]
          %v474 = vld [vmem:[#allocation8 + $0x38] sm:$0xf]
          %v475 = vld [vmem:[#allocation8 + $0x3c] sm:$0xf]
          %v476 = vld [vmem:[%s4] sm:$0x1]
          %v478 = vlaneseq
          %v479 = vshrl.u32 %v478, 7
          %v480 = vsub.s32 0, %v479
          %v481 = vrot.slane %v476, %v480
          %v499 = vunpack.c.l.b16 %v460
          %v500 = vunpack.c.l.b16 %v461
          %v501 = vunpack.c.l.b16 %v462
          %v502 = vunpack.c.l.b16 %v463
          %v503 = vunpack.c.l.b16 %v464
          %v504 = vunpack.c.l.b16 %v465
          %v505 = vunpack.c.l.b16 %v466
          %v506 = vunpack.c.l.b16 %v467
          %v507 = vunpack.c.l.b16 %v468
          %v508 = vunpack.c.l.b16 %v469
          %v509 = vunpack.c.l.b16 %v470
          %v510 = vunpack.c.l.b16 %v471
          %v511 = vunpack.c.l.b16 %v472
          %v512 = vunpack.c.l.b16 %v473
          %v513 = vunpack.c.l.b16 %v474
          %v514 = vunpack.c.l.b16 %v475
          %v515 = vpack.c.b16 %v500, %v499
          %v516 = vpack.c.b16 %v502, %v501
          %v517 = vpack.c.b16 %v504, %v503
          %v518 = vpack.c.b16 %v506, %v505
          %v519 = vpack.c.b16 %v508, %v507
          %v520 = vpack.c.b16 %v510, %v509
          %v521 = vpack.c.b16 %v512, %v511
          %v522 = vpack.c.b16 %v514, %v513
          %531 = vmatprep.subr.bf16.mxu0 0
          %532 = vmatpush1.bf16.msra.mxu0 %v522
          %533 = vmatprep.subr.bf16.mxu0 0
          %534 = vmatpush1.bf16.msra.mxu0 %v521
          %535 = vmatprep.subr.bf16.mxu0 0
          %536 = vmatpush1.bf16.msra.mxu0 %v520
          %537 = vmatprep.subr.bf16.mxu0 0
          %538 = vmatpush1.bf16.msra.mxu0 %v519
          %539 = vmatprep.subr.bf16.mxu0 0
          %540 = vmatpush1.bf16.msra.mxu0 %v518
          %541 = vmatprep.subr.bf16.mxu0 0
          %542 = vmatpush1.bf16.msra.mxu0 %v517
          %543 = vmatprep.subr.bf16.mxu0 0
          %544 = vmatpush1.bf16.msra.mxu0 %v516
          %545 = vmatprep.subr.bf16.mxu0 0
          %546 = vmatpush1.bf16.msra.mxu0 %v515
          %547 = vmatprep.subr.bf16.mxu0 0
          %548 = vmatpush2.bf16.msra.mxu0 0
          %549 = vmatprep.subr.bf16.mxu0 0
          %550 = vmatpush2.bf16.msra.mxu0 0
          %551 = vmatprep.subr.bf16.mxu0 0
          %552 = vmatpush2.bf16.msra.mxu0 0
          %553 = vmatprep.subr.bf16.mxu0 0
          %554 = vmatpush2.bf16.msra.mxu0 0
          %555 = vmatprep.subr.bf16.mxu0 0
          %556 = vmatpush2.bf16.msra.mxu0 0
          %557 = vmatprep.subr.bf16.mxu0 0
          %558 = vmatpush2.bf16.msra.mxu0 0
          %559 = vmatprep.subr.bf16.mxu0 0
          %560 = vmatpush2.bf16.msra.mxu0 0
          %561 = vmatprep.subr.bf16.mxu0 0
          %562 = vmatpush2.bf16.msra.mxu0 0
          %563 = vmatprep.mubr.bf16.mxu0 0
          %564 = vmatmul.mubr.bf16.gmra.mxu0 %v459
          %v565 = vpop.f32.mrf.mxu0
          %v566 = vadd.f32 %v481, %v565
          %v567 = vpop.f32.mrf.mxu0
          %v568 = vpop.f32.mrf.mxu0
          %v569 = vadd.f32 %v481, %v568
          %v570 = vpop.f32.mrf.mxu0
          %571 = vdwg.mxu0
          %v572 = vmax.f32 %v566, 0.0
          %v573 = vmax.f32 %v569, 0.0
          %v574 = vpack.c.bf16 %v573, %v572
          %v576 = vunpack.c.l.b16 %v574
          %v577 = vunpack.c.h.b16 %v574
          %v578 = vpack.c.b16 %v576, %v576
          %v579 = vpack.c.b16 %v577, %v577
          %582 = vst [vmem:[%s312] sm:$0xf] %v578
          %583 = vst [vmem:[%s312 + $0x4] sm:$0xf] %v579
        $region60: #{tpu_custom_call.1} parent=39 // pred_fallthru
          _
        %s584 = sand.u32 %s162, 1
        %s585 = scalar_lea.sflag [#allocation5], %s584
        %s586 = sand.u32 %s162, 1
        %s587 = smul.addr %s586, 8
        %s588 = scalar_lea.vmem [#allocation9], %s587
        // Predicated region
        $region61: #{tpu_custom_call.1} parent=39 // pred_check
          %p589 = pneg %p172
        $region62: #{tpu_custom_call.1} parent=39 // pred_check_branch
          %591 = sbr.rel (%p589) target = $region64
        $region63: #{tpu_custom_call.1} parent=39 // pred_region
          %s592 = smul.u32 2, %s29
          %s594 = ssub.s32 128, 128
          %595 = vsyncadd %s585, %s594
          %s596 = smul.addr %s592, 64
          %s597 = scalar_lea.hbm %s5, %s596
          %s598 = sshll.u32 %s588, 4
          %s599 = int_to_ptr.vmem [resolvable:$true] %s598
          %604 = dma.vmem_to_hbm [thread:$0]  %s599, 128, %s597, %s585, 64, 64, 4
        $region64: #{tpu_custom_call.1} parent=39 // pred_fallthru
          _
      $region40: #{tpu_custom_call.1} parent=5 // pred_fallthru
        _
      %p605 = scmp.le.s32.totalorder 2, %s20
      // Predicated region
      $region65: #{tpu_custom_call.1} parent=5 // pred_check
        %p606 = pneg %p605
      $region66: #{tpu_custom_call.1} parent=5 // pred_check_branch
        %608 = sbr.rel (%p606) target = $region68
      $region67: #{tpu_custom_call.1} parent=5 // pred_region
        %s609 = ssub.s32 %s20, 2
        // Predicated region
        $region69: #{tpu_custom_call.1} parent=67 // pred_check
          %p610 = pneg %p178
        $region70: #{tpu_custom_call.1} parent=67 // pred_check_branch
          %612 = sbr.rel (%p610) target = $region72
        $region71: #{tpu_custom_call.1} parent=67 // pred_region
          %s613 = sand.u32 %s163, 1
          %s614 = scalar_lea.sflag [#allocation5], %s613
          %s615 = sand.u32 %s163, 1
          %s616 = smul.addr %s615, 8
          %s617 = scalar_lea.vmem [#allocation9], %s616
          %618 = dma.done %s614, 128
        $region72: #{tpu_custom_call.1} parent=67 // pred_fallthru
          _
      $region68: #{tpu_custom_call.1} parent=5 // pred_fallthru
        _
    $region6: #{tpu_custom_call.1} parent=1 // loop_footer
      %s24 = sadd.s32 1, %s20
    $region7: #{tpu_custom_call.1} parent=1 // loop_footer_branch
      %19 = sbr.rel target = $region3
    $region8: #{tpu_custom_call.1} parent=1 // loop_exit
      _
    %619 = vsyncpa [#allocation4], 1
    %s620 = scalar_lea.sflag [#allocation4], 1
    %621 = vsyncpa %s620, 1
    %622 = vsyncpa [#allocation7], 1
    %s623 = scalar_lea.sflag [#allocation7], 1
    %624 = vsyncpa %s623, 1
    %625 = vsyncpa [#allocation5], 1
    %s626 = scalar_lea.sflag [#allocation5], 1
    %627 = vsyncpa %s626, 1

</llo_original>
